<compile_context>
chip_gen: v6e
topology: v6e:2x2x1
jax: 0.10.0
libtpu: 0.0.40
codegen_flags: <defaults>
</compile_context>

<pallas_src>
import functools

import jax
import jax.numpy as jnp
from jax.experimental import pallas as pl
from jax.experimental.pallas import tpu as pltpu


_LAYER_DIMS = (512, 256, 128, 64, 32, 32)   # hidden widths of mu_network


def _round_up(x, m):
    return ((x + m - 1) // m) * m


# ----------------------------- packed layouts -------------------------------

def _bias_layout(out_pad):
    """True widths + 128-lane-aligned static offsets of the packed bias row."""
    widths = _LAYER_DIMS + (out_pad,)            # (512,256,128,64,32,32,out_pad)
    offs, o = [], 0
    for w in widths:
        offs.append(o)
        o += _round_up(w, 128)                   # every offset stays 128-aligned
    return widths, tuple(offs), o                # total packed width


def _tail_layout(out_pad):
    """Row offsets / shapes of w4..w7 packed row-wise into one bf16 buffer."""
    in_dims = _LAYER_DIMS[2:]                    # (128, 64, 32, 32)
    out_dims = _LAYER_DIMS[3:] + (out_pad,)      # (64, 32, 32, out_pad)
    offs, o = [], 0
    for d in in_dims:
        offs.append(o)                           # 0,128,192,224: multiples of 16
        o += d                                   #   (bf16 sublane tile)
    lane = max(128, max(out_dims))
    return tuple(offs), in_dims, out_dims, o, lane


# ----------------------------- Pallas kernel --------------------------------

def _make_decoder_kernel(out_pad):
    b_widths, b_offs, _ = _bias_layout(out_pad)
    t_offs, t_in, t_out, _, _ = _tail_layout(out_pad)

    def kernel(slopes_ref,          # SMEM (6,) f32   shared PReLU slopes
               x_ref,               # VMEM (tm, L+C) f32
               w1_ref, w2_ref, w3_ref,      # bf16 (in, out) weights
               wt_ref,              # bf16 (256, lane) packed w4..w7
               b_ref,               # f32  (1, total) packed biases
               out_ref):            # f32  (tm, out_pad)
        def mm(h, w):
            # bf16 MXU matmul with f32 accumulation; bias/PReLU stay f32.
            return jnp.dot(h.astype(jnp.bfloat16), w,
                           preferred_element_type=jnp.float32)

        def bias(k):                               # static (1, width) slice
            return b_ref[:, b_offs[k]:b_offs[k] + b_widths[k]]

        def tail_w(k):                             # static slice = w_{4+k}
            r = t_offs[k]
            return wt_ref[r:r + t_in[k], 0:t_out[k]]

        def prelu(h, k):
            a = slopes_ref[k]                      # scalar load from SMEM
            return jnp.where(h >= 0.0, h, a * h)

        h = prelu(mm(x_ref[...], w1_ref[...]) + bias(0), 0)
        # nn.Dropout(0.8) -> identity at inference
        h = prelu(mm(h, w2_ref[...]) + bias(1), 1)
        # nn.Dropout(0.8) -> identity at inference
        h = prelu(mm(h, w3_ref[...]) + bias(2), 2)
        # nn.Dropout()    -> identity at inference
        h = prelu(mm(h, tail_w(0)) + bias(3), 3)
        h = prelu(mm(h, tail_w(1)) + bias(4), 4)
        h = prelu(mm(h, tail_w(2)) + bias(5), 5)
        out_ref[...] = (mm(h, tail_w(3)) + bias(6)).astype(out_ref.dtype)

    return kernel


# ----------------------------- tile heuristic -------------------------------

def _choose_tm(batch, device_kind):
    kind = device_kind.lower()
    is_v5e = ("v5e" in kind) or ("v5 lite" in kind) or ("v5lite" in kind)
    max_tile = 128 if is_v5e else 512            # MXU-M sweet spot per generation
    # v7x: 2 TensorCores per chip -> make large batches give >= 2 grid steps so
    # the "parallel" axis actually shards across both cores.
    if "v7" in kind and batch >= 256:
        max_tile = min(max_tile, _round_up(pl.cdiv(batch, 2), 8))
    if batch <= max_tile:
        return _round_up(batch, 8)               # single tile, minimal padding
    # Largest tile <= max_tile (multiple of 8) keeping padded rows <= ~12.5%.
    cands, t = [], max_tile
    while t >= 64:
        cands.append(_round_up(t, 8))
        t //= 2
    if not cands:
        cands = [_round_up(max_tile, 8)]
    for tm in cands:
        padded = _round_up(batch, tm)
        if (padded - batch) * 8 <= padded:
            return tm
    return cands[-1]


# ----------------------------- parameters -----------------------------------

def init_decoder_params(key, latent_size, cond_size, output_size):
    """Deterministic synthetic parameters mirroring the nn.Module shapes.

    Returns (slopes, w1, w2, w3, w_tail_packed, bias_packed):
      * weights stored (in, out) = transpose of PyTorch Linear.weight, bf16
      * w4..w7 packed row-wise in one bf16 buffer (output cols zero-padded)
      * all 7 biases packed into one (1, total) f32 row, 128-lane-aligned
      * slopes: (6,) f32 shared PReLU slopes (PyTorch default 0.25)
    """
    dims = [latent_size + cond_size] + list(_LAYER_DIMS) + [output_size]
    ws, bs = [], []
    for d_in, d_out in zip(dims[:-1], dims[1:]):
        key, kw, kb = jax.random.split(key, 3)
        scale = 1.0 / float(d_in) ** 0.5
        ws.append(jax.random.uniform(kw, (d_in, d_out), jnp.float32, -scale, scale))
        bs.append(jax.random.uniform(kb, (d_out,), jnp.float32, -scale, scale))

    out_pad = _round_up(output_size, 128)
    b_widths, b_offs, b_total = _bias_layout(out_pad)
    t_offs, t_in, t_out, t_rows, t_lane = _tail_layout(out_pad)

    bias_packed = jnp.zeros((1, b_total), jnp.float32)
    for k, b in enumerate(bs):
        bias_packed = bias_packed.at[0, b_offs[k]:b_offs[k] + b.shape[0]].set(b)

    w_tail = jnp.zeros((t_rows, t_lane), jnp.bfloat16)
    for k, w in enumerate(ws[3:]):
        w_tail = w_tail.at[t_offs[k]:t_offs[k] + w.shape[0], :w.shape[1]].set(
            w.astype(jnp.bfloat16))

    slopes = jnp.full((len(_LAYER_DIMS),), 0.25, jnp.float32)
    return (slopes,
            ws[0].astype(jnp.bfloat16),
            ws[1].astype(jnp.bfloat16),
            ws[2].astype(jnp.bfloat16),
            w_tail,
            bias_packed)


# ----------------------------- forward wrapper ------------------------------

@functools.partial(jax.jit, static_argnames=("output_size",))
def decoder_forward(z, y, params, *, output_size):
    """Equivalent of Decoder.forward(z, y) -> mu."""
    slopes, w1, w2, w3, w_tail, bias_packed = params

    # torch.cat([z, y], dim=1): a tiny (B, L+C) concat in the caller merges the
    # two narrow input DMA streams and lets layer 1 be a single K=(L+C) matmul.
    x = jnp.concatenate([z.astype(jnp.float32), y.astype(jnp.float32)], axis=1)
    batch, in_dim = x.shape
    out_pad = w_tail.shape[1]          # padded (lane-dense) output width >= 128

    tm = _choose_tm(batch, jax.devices()[0].device_kind)
    padded = _round_up(batch, tm)
    if padded != batch:
        x = jnp.pad(x, ((0, padded - batch), (0, 0)))
    grid = (padded // tm,)

    def resident(arr):
        # Constant block index -> loaded once, VMEM-resident across grid steps;
        # single-buffered (no pointless double buffer for an invariant operand).
        nd = arr.ndim
        return pl.BlockSpec(arr.shape, lambda i: (0,) * nd,
                            pipeline_mode=pl.Buffered(1))

    in_specs = [
        pl.BlockSpec(memory_space=pltpu.MemorySpace.SMEM),     # PReLU slopes
        pl.BlockSpec((tm, in_dim), lambda i: (i, 0)),          # x batch tile
        resident(w1), resident(w2), resident(w3),
        resident(w_tail), resident(bias_packed),
    ]

    out = pl.pallas_call(
        _make_decoder_kernel(out_pad),
        out_shape=jax.ShapeDtypeStruct((padded, out_pad), jnp.float32),
        grid=grid,
        in_specs=in_specs,
        out_specs=pl.BlockSpec((tm, out_pad), lambda i: (i, 0)),
        compiler_params=pltpu.CompilerParams(
            dimension_semantics=("parallel",)),
    )(slopes, x, w1, w2, w3, w_tail, bias_packed)

    return out[:batch, :output_size]


# Pure-JAX reference (same bf16-weight / f32-accumulate math) for checking.
def decoder_forward_ref(z, y, params, output_size):
    slopes, w1, w2, w3, w_tail, bias_packed = params
    out_pad = w_tail.shape[1]
    b_widths, b_offs, _ = _bias_layout(out_pad)
    t_offs, t_in, t_out, _, _ = _tail_layout(out_pad)

    weights = [w1, w2, w3] + [
        w_tail[t_offs[k]:t_offs[k] + t_in[k], :t_out[k]] for k in range(4)]

    h = jnp.concatenate([z, y], axis=1).astype(jnp.float32)
    for k, w in enumerate(weights):
        b = bias_packed[:, b_offs[k]:b_offs[k] + b_widths[k]]
        h = jnp.dot(h.astype(jnp.bfloat16), w,
                    preferred_element_type=jnp.float32) + b
        if k < 6:
            h = jnp.where(h >= 0.0, h, slopes[k] * h)
    return h[:, :output_size]


# --------------------------------- driver -----------------------------------

if __name__ == "__main__":
    latent_size = 8
    cond_size = 8
    output_size = 4
    batch = 8

    key = jax.random.PRNGKey(0)
    kz, ky, kp = jax.random.split(key, 3)

    z = jax.random.normal(kz, (batch, latent_size), jnp.float32)
    y = jax.random.normal(ky, (batch, cond_size), jnp.float32)
    params = init_decoder_params(kp, latent_size, cond_size, output_size)

    mu = decoder_forward(z, y, params, output_size=output_size)
    mu = jax.block_until_ready(mu)

    mu_ref = decoder_forward_ref(z, y, params, output_size)
    assert mu.shape == (batch, output_size)
    assert jnp.allclose(mu, mu_ref, atol=2e-3, rtol=2e-3), \
        "mismatch vs JAX reference"

    print("KERNEL_OK")
</pallas_src>

<mosaic_0001>
module attributes {stable_mosaic.version = 11 : i64} {
  func.func @kernel(%arg0: i32, %arg1: memref<6xf32, #tpu.memory_space<smem>>, %arg2: memref<8x16xf32, #tpu.memory_space<vmem>>, %arg3: memref<16x512xbf16, #tpu.memory_space<vmem>>, %arg4: memref<512x256xbf16, #tpu.memory_space<vmem>>, %arg5: memref<256x128xbf16, #tpu.memory_space<vmem>>, %arg6: memref<256x128xbf16, #tpu.memory_space<vmem>>, %arg7: memref<1x1408xf32, #tpu.memory_space<vmem>>, %arg8: memref<8x128xf32, #tpu.memory_space<vmem>>) attributes {dimension_semantics = [#tpu.dimension_semantics<parallel>], iteration_bounds = array<i64: 1>, scalar_prefetch = 0 : i64, scratch_operands = 0 : i64, tpu.core_type = #tpu.core_type<tc>, window_params = [{transform_indices = @transform_0, window_bounds = array<i64: 6>}, {transform_indices = @transform_1, window_bounds = array<i64: 8, 16>}, {pipeline_mode = #tpu.pipeline_mode<synchronous>, transform_indices = @transform_2, window_bounds = array<i64: 16, 512>}, {pipeline_mode = #tpu.pipeline_mode<synchronous>, transform_indices = @transform_3, window_bounds = array<i64: 512, 256>}, {pipeline_mode = #tpu.pipeline_mode<synchronous>, transform_indices = @transform_4, window_bounds = array<i64: 256, 128>}, {pipeline_mode = #tpu.pipeline_mode<synchronous>, transform_indices = @transform_5, window_bounds = array<i64: 256, 128>}, {pipeline_mode = #tpu.pipeline_mode<synchronous>, transform_indices = @transform_6, window_bounds = array<i64: 1, 1408>}, {transform_indices = @transform_7, window_bounds = array<i64: 8, 128>}]} {
    %c0 = arith.constant 0 : index
    %c0_0 = arith.constant 0 : index
    %0 = vector.load %arg2[%c0, %c0_0] : memref<8x16xf32, #tpu.memory_space<vmem>>, vector<8x16xf32>
    %c0_1 = arith.constant 0 : index
    %c0_2 = arith.constant 0 : index
    %1 = vector.load %arg3[%c0_1, %c0_2] : memref<16x512xbf16, #tpu.memory_space<vmem>>, vector<16x512xbf16>
    %2 = arith.truncf %0 : vector<8x16xf32> to vector<8x16xbf16>
    %cst = arith.constant dense<0.000000e+00> : vector<8x512xf32>
    %3 = tpu.matmul %2, %1, %cst {dimension_numbers = #tpu.dot_dimension_numbers<[1], [0], [0], [1], [0, 0, 1, 1], [], []>} : vector<8x16xbf16>, vector<16x512xbf16>, vector<8x512xf32> -> vector<8x512xf32>
    %c0_3 = arith.constant 0 : index
    %c0_4 = arith.constant 0 : index
    %4 = vector.load %arg7[%c0_3, %c0_4] : memref<1x1408xf32, #tpu.memory_space<vmem>>, vector<1x512xf32>
    %5 = vector.broadcast %4 : vector<1x512xf32> to vector<8x512xf32>
    %6 = arith.addf %3, %5 : vector<8x512xf32>
    %c0_5 = arith.constant 0 : index
    %7 = memref.load %arg1[%c0_5] : memref<6xf32, #tpu.memory_space<smem>>
    %cst_6 = arith.constant 0.000000e+00 : f32
    %8 = vector.broadcast %cst_6 : f32 to vector<8x512xf32>
    %9 = arith.cmpf oge, %6, %8 : vector<8x512xf32>
    %10 = vector.broadcast %7 : f32 to vector<8x512xf32>
    %11 = arith.mulf %10, %6 : vector<8x512xf32>
    %12 = arith.select %9, %6, %11 : vector<8x512xi1>, vector<8x512xf32>
    %c0_7 = arith.constant 0 : index
    %c0_8 = arith.constant 0 : index
    %13 = vector.load %arg4[%c0_7, %c0_8] : memref<512x256xbf16, #tpu.memory_space<vmem>>, vector<512x256xbf16>
    %14 = arith.truncf %12 : vector<8x512xf32> to vector<8x512xbf16>
    %cst_9 = arith.constant dense<0.000000e+00> : vector<8x256xf32>
    %15 = tpu.matmul %14, %13, %cst_9 {dimension_numbers = #tpu.dot_dimension_numbers<[1], [0], [0], [1], [0, 0, 1, 1], [], []>} : vector<8x512xbf16>, vector<512x256xbf16>, vector<8x256xf32> -> vector<8x256xf32>
    %c0_10 = arith.constant 0 : index
    %c512 = arith.constant 512 : index
    %16 = vector.load %arg7[%c0_10, %c512] : memref<1x1408xf32, #tpu.memory_space<vmem>>, vector<1x256xf32>
    %17 = vector.broadcast %16 : vector<1x256xf32> to vector<8x256xf32>
    %18 = arith.addf %15, %17 : vector<8x256xf32>
    %c1 = arith.constant 1 : index
    %19 = memref.load %arg1[%c1] : memref<6xf32, #tpu.memory_space<smem>>
    %cst_11 = arith.constant 0.000000e+00 : f32
    %20 = vector.broadcast %cst_11 : f32 to vector<8x256xf32>
    %21 = arith.cmpf oge, %18, %20 : vector<8x256xf32>
    %22 = vector.broadcast %19 : f32 to vector<8x256xf32>
    %23 = arith.mulf %22, %18 : vector<8x256xf32>
    %24 = arith.select %21, %18, %23 : vector<8x256xi1>, vector<8x256xf32>
    %c0_12 = arith.constant 0 : index
    %c0_13 = arith.constant 0 : index
    %25 = vector.load %arg5[%c0_12, %c0_13] : memref<256x128xbf16, #tpu.memory_space<vmem>>, vector<256x128xbf16>
    %26 = arith.truncf %24 : vector<8x256xf32> to vector<8x256xbf16>
    %cst_14 = arith.constant dense<0.000000e+00> : vector<8x128xf32>
    %27 = tpu.matmul %26, %25, %cst_14 {dimension_numbers = #tpu.dot_dimension_numbers<[1], [0], [0], [1], [0, 0, 1, 1], [], []>} : vector<8x256xbf16>, vector<256x128xbf16>, vector<8x128xf32> -> vector<8x128xf32>
    %c0_15 = arith.constant 0 : index
    %c768 = arith.constant 768 : index
    %28 = vector.load %arg7[%c0_15, %c768] : memref<1x1408xf32, #tpu.memory_space<vmem>>, vector<1x128xf32>
    %29 = vector.broadcast %28 : vector<1x128xf32> to vector<8x128xf32>
    %30 = arith.addf %27, %29 : vector<8x128xf32>
    %c2 = arith.constant 2 : index
    %31 = memref.load %arg1[%c2] : memref<6xf32, #tpu.memory_space<smem>>
    %cst_16 = arith.constant 0.000000e+00 : f32
    %32 = vector.broadcast %cst_16 : f32 to vector<8x128xf32>
    %33 = arith.cmpf oge, %30, %32 : vector<8x128xf32>
    %34 = vector.broadcast %31 : f32 to vector<8x128xf32>
    %35 = arith.mulf %34, %30 : vector<8x128xf32>
    %36 = arith.select %33, %30, %35 : vector<8x128xi1>, vector<8x128xf32>
    %c0_17 = arith.constant 0 : index
    %c0_18 = arith.constant 0 : index
    %37 = vector.load %arg6[%c0_17, %c0_18] : memref<256x128xbf16, #tpu.memory_space<vmem>>, vector<128x64xbf16>
    %38 = arith.truncf %36 : vector<8x128xf32> to vector<8x128xbf16>
    %cst_19 = arith.constant dense<0.000000e+00> : vector<8x64xf32>
    %39 = tpu.matmul %38, %37, %cst_19 {dimension_numbers = #tpu.dot_dimension_numbers<[1], [0], [0], [1], [0, 0, 1, 1], [], []>} : vector<8x128xbf16>, vector<128x64xbf16>, vector<8x64xf32> -> vector<8x64xf32>
    %c0_20 = arith.constant 0 : index
    %c896 = arith.constant 896 : index
    %40 = vector.load %arg7[%c0_20, %c896] : memref<1x1408xf32, #tpu.memory_space<vmem>>, vector<1x64xf32>
    %41 = vector.broadcast %40 : vector<1x64xf32> to vector<8x64xf32>
    %42 = arith.addf %39, %41 : vector<8x64xf32>
    %c3 = arith.constant 3 : index
    %43 = memref.load %arg1[%c3] : memref<6xf32, #tpu.memory_space<smem>>
    %cst_21 = arith.constant 0.000000e+00 : f32
    %44 = vector.broadcast %cst_21 : f32 to vector<8x64xf32>
    %45 = arith.cmpf oge, %42, %44 : vector<8x64xf32>
    %46 = vector.broadcast %43 : f32 to vector<8x64xf32>
    %47 = arith.mulf %46, %42 : vector<8x64xf32>
    %48 = arith.select %45, %42, %47 : vector<8x64xi1>, vector<8x64xf32>
    %c128 = arith.constant 128 : index
    %c0_22 = arith.constant 0 : index
    %49 = vector.load %arg6[%c128, %c0_22] : memref<256x128xbf16, #tpu.memory_space<vmem>>, vector<64x32xbf16>
    %50 = arith.truncf %48 : vector<8x64xf32> to vector<8x64xbf16>
    %cst_23 = arith.constant dense<0.000000e+00> : vector<8x32xf32>
    %51 = tpu.matmul %50, %49, %cst_23 {dimension_numbers = #tpu.dot_dimension_numbers<[1], [0], [0], [1], [0, 0, 1, 1], [], []>} : vector<8x64xbf16>, vector<64x32xbf16>, vector<8x32xf32> -> vector<8x32xf32>
    %c0_24 = arith.constant 0 : index
    %c1024 = arith.constant 1024 : index
    %52 = vector.load %arg7[%c0_24, %c1024] : memref<1x1408xf32, #tpu.memory_space<vmem>>, vector<1x32xf32>
    %53 = vector.broadcast %52 : vector<1x32xf32> to vector<8x32xf32>
    %54 = arith.addf %51, %53 : vector<8x32xf32>
    %c4 = arith.constant 4 : index
    %55 = memref.load %arg1[%c4] : memref<6xf32, #tpu.memory_space<smem>>
    %cst_25 = arith.constant 0.000000e+00 : f32
    %56 = vector.broadcast %cst_25 : f32 to vector<8x32xf32>
    %57 = arith.cmpf oge, %54, %56 : vector<8x32xf32>
    %58 = vector.broadcast %55 : f32 to vector<8x32xf32>
    %59 = arith.mulf %58, %54 : vector<8x32xf32>
    %60 = arith.select %57, %54, %59 : vector<8x32xi1>, vector<8x32xf32>
    %c192 = arith.constant 192 : index
    %c0_26 = arith.constant 0 : index
    %61 = vector.load %arg6[%c192, %c0_26] : memref<256x128xbf16, #tpu.memory_space<vmem>>, vector<32x32xbf16>
    %62 = arith.truncf %60 : vector<8x32xf32> to vector<8x32xbf16>
    %cst_27 = arith.constant dense<0.000000e+00> : vector<8x32xf32>
    %63 = tpu.matmul %62, %61, %cst_27 {dimension_numbers = #tpu.dot_dimension_numbers<[1], [0], [0], [1], [0, 0, 1, 1], [], []>} : vector<8x32xbf16>, vector<32x32xbf16>, vector<8x32xf32> -> vector<8x32xf32>
    %c0_28 = arith.constant 0 : index
    %c1152 = arith.constant 1152 : index
    %64 = vector.load %arg7[%c0_28, %c1152] : memref<1x1408xf32, #tpu.memory_space<vmem>>, vector<1x32xf32>
    %65 = vector.broadcast %64 : vector<1x32xf32> to vector<8x32xf32>
    %66 = arith.addf %63, %65 : vector<8x32xf32>
    %c5 = arith.constant 5 : index
    %67 = memref.load %arg1[%c5] : memref<6xf32, #tpu.memory_space<smem>>
    %cst_29 = arith.constant 0.000000e+00 : f32
    %68 = vector.broadcast %cst_29 : f32 to vector<8x32xf32>
    %69 = arith.cmpf oge, %66, %68 : vector<8x32xf32>
    %70 = vector.broadcast %67 : f32 to vector<8x32xf32>
    %71 = arith.mulf %70, %66 : vector<8x32xf32>
    %72 = arith.select %69, %66, %71 : vector<8x32xi1>, vector<8x32xf32>
    %c224 = arith.constant 224 : index
    %c0_30 = arith.constant 0 : index
    %73 = vector.load %arg6[%c224, %c0_30] : memref<256x128xbf16, #tpu.memory_space<vmem>>, vector<32x128xbf16>
    %74 = arith.truncf %72 : vector<8x32xf32> to vector<8x32xbf16>
    %cst_31 = arith.constant dense<0.000000e+00> : vector<8x128xf32>
    %75 = tpu.matmul %74, %73, %cst_31 {dimension_numbers = #tpu.dot_dimension_numbers<[1], [0], [0], [1], [0, 0, 1, 1], [], []>} : vector<8x32xbf16>, vector<32x128xbf16>, vector<8x128xf32> -> vector<8x128xf32>
    %c0_32 = arith.constant 0 : index
    %c1280 = arith.constant 1280 : index
    %76 = vector.load %arg7[%c0_32, %c1280] : memref<1x1408xf32, #tpu.memory_space<vmem>>, vector<1x128xf32>
    %77 = vector.broadcast %76 : vector<1x128xf32> to vector<8x128xf32>
    %78 = arith.addf %75, %77 : vector<8x128xf32>
    %c0_33 = arith.constant 0 : index
    %c0_34 = arith.constant 0 : index
    %79 = vector.load %arg8[%c0_33, %c0_34] : memref<8x128xf32, #tpu.memory_space<vmem>>, vector<8x128xf32>
    tpu.vector_store %arg8[%c0_33, %c0_34], %78 {strides = array<i32>} : memref<8x128xf32, #tpu.memory_space<vmem>>, vector<8x128xf32>,
    return
  }
  func.func @transform_0(%arg0: i32) -> i32 {
    %c0_i32 = arith.constant 0 : i32
    %c0_i32_0 = arith.constant 0 : i32
    return %c0_i32 : i32
  }
  func.func @transform_1(%arg0: i32) -> (i32, i32) {
    %c0_i32 = arith.constant 0 : i32
    %c0_i32_0 = arith.constant 0 : i32
    return %arg0, %c0_i32 : i32, i32
  }
  func.func @transform_2(%arg0: i32) -> (i32, i32) {
    %c0_i32 = arith.constant 0 : i32
    %c0_i32_0 = arith.constant 0 : i32
    %c0_i32_1 = arith.constant 0 : i32
    return %c0_i32, %c0_i32_0 : i32, i32
  }
  func.func @transform_3(%arg0: i32) -> (i32, i32) {
    %c0_i32 = arith.constant 0 : i32
    %c0_i32_0 = arith.constant 0 : i32
    %c0_i32_1 = arith.constant 0 : i32
    return %c0_i32, %c0_i32_0 : i32, i32
  }
  func.func @transform_4(%arg0: i32) -> (i32, i32) {
    %c0_i32 = arith.constant 0 : i32
    %c0_i32_0 = arith.constant 0 : i32
    %c0_i32_1 = arith.constant 0 : i32
    return %c0_i32, %c0_i32_0 : i32, i32
  }
  func.func @transform_5(%arg0: i32) -> (i32, i32) {
    %c0_i32 = arith.constant 0 : i32
    %c0_i32_0 = arith.constant 0 : i32
    %c0_i32_1 = arith.constant 0 : i32
    return %c0_i32, %c0_i32_0 : i32, i32
  }
  func.func @transform_6(%arg0: i32) -> (i32, i32) {
    %c0_i32 = arith.constant 0 : i32
    %c0_i32_0 = arith.constant 0 : i32
    %c0_i32_1 = arith.constant 0 : i32
    return %c0_i32, %c0_i32_0 : i32, i32
  }
  func.func @transform_7(%arg0: i32) -> (i32, i32) {
    %c0_i32 = arith.constant 0 : i32
    %c0_i32_0 = arith.constant 0 : i32
    return %arg0, %c0_i32 : i32, i32
  }
}

</mosaic_0001>

<llo_original>
// kernel: decoder_forward.1
$region0: #{decoder_forward.1}
  #allocation0 [shape = 'u32[]', space=smem, size = 0x4, offset = 0x4, fixed_abs, tag = 'smem constant byte address 0x4 - core index']
  #allocation1 [shape = 'u32[144,128]{1,0:T(1,128)}', space=vmem, size = 0x12000, scoped, tag = 'internal scratch']
  %s0 = inlined_call_operand.vmem [shape: f32[6], index: 0, kind: input, shape index: {}]
  %s1 = inlined_call_operand.vmem [shape: f32[8,16], index: 1, kind: input, shape index: {}]
  %s2 = inlined_call_operand.hbm [shape: bf16[16,512], index: 2, kind: input, shape index: {}]
  %s3 = inlined_call_operand.hbm [shape: bf16[512,256], index: 3, kind: input, shape index: {}]
  %s4 = inlined_call_operand.hbm [shape: bf16[256,128], index: 4, kind: input, shape index: {}]
  %s5 = inlined_call_operand.hbm [shape: bf16[256,128], index: 5, kind: input, shape index: {}]
  %s6 = inlined_call_operand.vmem [shape: f32[1,1408], index: 6, kind: input, shape index: {}]
  %s7 = inlined_call_operand.vmem [shape: f32[8,128], index: 7, kind: output, shape index: {}]
  %s8 = sld [smem:[#allocation0]]
  $region58: #{decoder_forward.1} parent=0
    _
  %s10 = ssub.s32 1, %s8
  %s11 = scalar_select 0, %s10, %s8
  $region1: #{decoder_forward.1} parent=0
    #allocation2 [shape = 'u8[512]{0}', space=smem, size = 0x200, scoped, tag = 'input window, operand 0, single buffered']
    #allocation3 [shape = 's32[1]{0}', space=sflag, size = 0x4, scoped, tag = 'scoped memory for decoder_forward.1']
    #allocation4 [shape = 's32[1]{0}', space=sflag, size = 0x4, scoped, tag = 'scoped memory for decoder_forward.1']
    #allocation5 [shape = 'u8[16384]{0}', space=vmem, size = 0x4000, scoped, tag = 'input window, operand 2, single buffered']
    #allocation6 [shape = 'u8[262144]{0}', space=vmem, size = 0x40000, scoped, tag = 'input window, operand 3, single buffered']
    #allocation7 [shape = 's32[1]{0}', space=sflag, size = 0x4, scoped, tag = 'scoped memory for decoder_forward.1']
    #allocation8 [shape = 'u8[65536]{0}', space=vmem, size = 0x10000, scoped, tag = 'input window, operand 4, single buffered']
    #allocation9 [shape = 'u8[65536]{0}', space=vmem, size = 0x10000, scoped, tag = 'input window, operand 5, single buffered']
    #allocation10 [shape = 's32[1]{0}', space=sflag, size = 0x4, scoped, tag = 'scoped memory for decoder_forward.1']
    %12 = vsyncpa [#allocation4], 0
    %13 = vsyncpa [#allocation3], 0
    %14 = vsyncpa [#allocation7], 0
    %15 = vsyncpa [#allocation10], 0
    // Predicated region
    $region2: #{decoder_forward.1} parent=1 // pred_check
      _
    $region3: #{decoder_forward.1} parent=1 // pred_check_branch
      %17 = sbr.rel (0) target = $region5
    $region4: #{decoder_forward.1} parent=1 // pred_region
      %s19 = ssub.s32 16, 16
      %20 = vsyncadd [#allocation4], %s19
      %s22 = sshll.u32 %s0, 4
      %s23 = int_to_ptr.vmem [resolvable:$true] %s22
      %25 = dma.vmem_to_smem %s23, 16, [#allocation2], [#allocation4]
    $region5: #{decoder_forward.1} parent=1 // pred_fallthru
      _
    // Predicated region
    $region6: #{decoder_forward.1} parent=1 // pred_check
      _
    $region7: #{decoder_forward.1} parent=1 // pred_check_branch
      %27 = sbr.rel (0) target = $region9
    $region8: #{decoder_forward.1} parent=1 // pred_region
      _
    $region9: #{decoder_forward.1} parent=1 // pred_fallthru
      _
    // Predicated region
    $region10: #{decoder_forward.1} parent=1 // pred_check
      _
    $region11: #{decoder_forward.1} parent=1 // pred_check_branch
      %29 = sbr.rel (0) target = $region13
    $region12: #{decoder_forward.1} parent=1 // pred_region
      %s31 = ssub.s32 512, 512
      %32 = vsyncadd [#allocation3], %s31
      %s33 = sshll.u32 [#allocation5], 4
      %s34 = int_to_ptr.vmem [resolvable:$true] %s33
      %39 = dma.hbm_to_vmem [thread:$0]  %s2, 512, %s34, [#allocation3], 256, 256, 16
    $region13: #{decoder_forward.1} parent=1 // pred_fallthru
      _
    // Predicated region
    $region14: #{decoder_forward.1} parent=1 // pred_check
      _
    $region15: #{decoder_forward.1} parent=1 // pred_check_branch
      %41 = sbr.rel (0) target = $region17
    $region16: #{decoder_forward.1} parent=1 // pred_region
      %s43 = ssub.s32 8192, 8192
      %44 = vsyncadd [#allocation7], %s43
      %s45 = sshll.u32 [#allocation6], 4
      %s46 = int_to_ptr.vmem [resolvable:$true] %s45
      %51 = dma.hbm_to_vmem [thread:$0]  %s3, 8192, %s46, [#allocation7], 128, 128, 8
    $region17: #{decoder_forward.1} parent=1 // pred_fallthru
      _
    // Predicated region
    $region18: #{decoder_forward.1} parent=1 // pred_check
      _
    $region19: #{decoder_forward.1} parent=1 // pred_check_branch
      %53 = sbr.rel (0) target = $region21
    $region20: #{decoder_forward.1} parent=1 // pred_region
      %s55 = ssub.s32 2048, 2048
      %56 = vsyncadd [#allocation7], %s55
      %s57 = sshll.u32 [#allocation8], 4
      %s58 = int_to_ptr.vmem [resolvable:$true] %s57
      %63 = dma.hbm_to_vmem [thread:$0]  %s4, 2048, %s58, [#allocation7], 64, 64, 4
    $region21: #{decoder_forward.1} parent=1 // pred_fallthru
      _
    // Predicated region
    $region22: #{decoder_forward.1} parent=1 // pred_check
      _
    $region23: #{decoder_forward.1} parent=1 // pred_check_branch
      %65 = sbr.rel (0) target = $region25
    $region24: #{decoder_forward.1} parent=1 // pred_region
      %s67 = ssub.s32 2048, 2048
      %68 = vsyncadd [#allocation10], %s67
      %s69 = sshll.u32 [#allocation9], 4
      %s70 = int_to_ptr.vmem [resolvable:$true] %s69
      %75 = dma.hbm_to_vmem [thread:$0]  %s5, 2048, %s70, [#allocation10], 64, 64, 4
    $region25: #{decoder_forward.1} parent=1 // pred_fallthru
      _
    // Predicated region
    $region26: #{decoder_forward.1} parent=1 // pred_check
      _
    $region27: #{decoder_forward.1} parent=1 // pred_check_branch
      %77 = sbr.rel (0) target = $region29
    $region28: #{decoder_forward.1} parent=1 // pred_region
      _
    $region29: #{decoder_forward.1} parent=1 // pred_fallthru
      _
    // Predicated region
    $region30: #{decoder_forward.1} parent=1 // pred_check
      _
    $region31: #{decoder_forward.1} parent=1 // pred_check_branch
      %79 = sbr.rel (0) target = $region33
    $region32: #{decoder_forward.1} parent=1 // pred_region
      %80 = dma.done [#allocation4], 16
    $region33: #{decoder_forward.1} parent=1 // pred_fallthru
      _
    // Predicated region
    $region34: #{decoder_forward.1} parent=1 // pred_check
      _
    $region35: #{decoder_forward.1} parent=1 // pred_check_branch
      %82 = sbr.rel (0) target = $region37
    $region36: #{decoder_forward.1} parent=1 // pred_region
      %83 = dma.done [#allocation3], 512
    $region37: #{decoder_forward.1} parent=1 // pred_fallthru
      _
    // Predicated region
    $region38: #{decoder_forward.1} parent=1 // pred_check
      _
    $region39: #{decoder_forward.1} parent=1 // pred_check_branch
      %85 = sbr.rel (0) target = $region41
    $region40: #{decoder_forward.1} parent=1 // pred_region
      %86 = dma.done [#allocation7], 8192
    $region41: #{decoder_forward.1} parent=1 // pred_fallthru
      _
    // Predicated region
    $region42: #{decoder_forward.1} parent=1 // pred_check
      _
    $region43: #{decoder_forward.1} parent=1 // pred_check_branch
      %88 = sbr.rel (0) target = $region45
    $region44: #{decoder_forward.1} parent=1 // pred_region
      %89 = dma.done [#allocation7], 2048
    $region45: #{decoder_forward.1} parent=1 // pred_fallthru
      _
    // Predicated region
    $region46: #{decoder_forward.1} parent=1 // pred_check
      _
    $region47: #{decoder_forward.1} parent=1 // pred_check_branch
      %91 = sbr.rel (0) target = $region49
    $region48: #{decoder_forward.1} parent=1 // pred_region
      %92 = dma.done [#allocation10], 2048
    $region49: #{decoder_forward.1} parent=1 // pred_fallthru
      _
    %93 = sfence
    %v95 = vld [vmem:[%s1] sm:$0xff]
    %v96 = vld [vmem:[#allocation5] sm:$0xff]
    %v97 = vld [vmem:[#allocation5 + $0x8] sm:$0xff]
    %v98 = vld [vmem:[#allocation5 + $0x10] sm:$0xff]
    %v99 = vld [vmem:[#allocation5 + $0x18] sm:$0xff]
    %v100 = vpack.c.bf16 %v95, %v95
    %v101 = vld [vmem:[%s6] sm:$0xf]
    %v103 = vlaneseq
    %v104 = vshrl.u32 %v103, 7
    %v105 = vsub.s32 0, %v104
    %v106 = vrot.slane %v101, %v105
    %v107 = vlaneseq
    %v108 = vshrl.u32 %v107, 7
    %v109 = vsub.s32 1, %v108
    %v110 = vrot.slane %v101, %v109
    %v111 = vlaneseq
    %v112 = vshrl.u32 %v111, 7
    %v113 = vsub.s32 2, %v112
    %v114 = vrot.slane %v101, %v113
    %v115 = vlaneseq
    %v116 = vshrl.u32 %v115, 7
    %v117 = vsub.s32 3, %v116
    %v118 = vrot.slane %v101, %v117
    %v127 = vunpack.c.l.b16 %v96
    %v128 = vunpack.c.h.b16 %v96
    %v129 = vunpack.c.l.b16 %v97
    %v130 = vunpack.c.h.b16 %v97
    %v131 = vunpack.c.l.b16 %v98
    %v132 = vunpack.c.h.b16 %v98
    %v133 = vunpack.c.l.b16 %v99
    %v134 = vunpack.c.h.b16 %v99
    %v135 = vpack.c.b16 %v131, %v127
    %v136 = vpack.c.b16 %v132, %v128
    %v137 = vpack.c.b16 %v133, %v129
    %v138 = vpack.c.b16 %v134, %v130
    %vm143 = vcmask 130048
    %v145 = vsel %vm143, %v100, 0
    %147 = vmatprep.subr.bf16.mxu0 0
    %148 = vmatpush1.bf16.msra.mxu0 0
    %149 = vmatprep.subr.bf16.mxu0 0
    %150 = vmatpush1.bf16.msra.mxu0 0
    %151 = vmatprep.subr.bf16.mxu0 0
    %152 = vmatpush1.bf16.msra.mxu0 0
    %153 = vmatprep.subr.bf16.mxu0 0
    %154 = vmatpush1.bf16.msra.mxu0 0
    %155 = vmatprep.subr.bf16.mxu0 0
    %156 = vmatpush1.bf16.msra.mxu0 0
    %157 = vmatprep.subr.bf16.mxu0 0
    %158 = vmatpush1.bf16.msra.mxu0 0
    %159 = vmatprep.subr.bf16.mxu0 0
    %160 = vmatpush1.bf16.msra.mxu0 0
    %161 = vmatprep.subr.bf16.mxu0 %v136
    %162 = vmatpush1.bf16.msra.mxu0 %v135
    %163 = vmatprep.subr.bf16.mxu0 0
    %164 = vmatpush2.bf16.msra.mxu0 0
    %165 = vmatprep.subr.bf16.mxu0 0
    %166 = vmatpush2.bf16.msra.mxu0 0
    %167 = vmatprep.subr.bf16.mxu0 0
    %168 = vmatpush2.bf16.msra.mxu0 0
    %169 = vmatprep.subr.bf16.mxu0 0
    %170 = vmatpush2.bf16.msra.mxu0 0
    %171 = vmatprep.subr.bf16.mxu0 0
    %172 = vmatpush2.bf16.msra.mxu0 0
    %173 = vmatprep.subr.bf16.mxu0 0
    %174 = vmatpush2.bf16.msra.mxu0 0
    %175 = vmatprep.subr.bf16.mxu0 0
    %176 = vmatpush2.bf16.msra.mxu0 0
    %177 = vmatprep.subr.bf16.mxu0 0
    %178 = vmatpush2.bf16.msra.mxu0 0
    %179 = vmatprep.mubr.bf16.mxu0 0
    %180 = vmatmul.mubr.bf16.gmra.mxu0 %v145
    %v181 = vpop.f32.mrf.mxu0
    %v182 = vadd.f32 %v106, %v181
    %v183 = vpop.f32.mrf.mxu0
    %v184 = vadd.f32 %v110, %v183
    %v185 = vpop.f32.mrf.mxu0
    %v186 = vpop.f32.mrf.mxu0
    %187 = vdwg.mxu0
    %188 = vmatprep.subr.bf16.mxu0 0
    %189 = vmatpush1.bf16.msra.mxu0 0
    %190 = vmatprep.subr.bf16.mxu0 0
    %191 = vmatpush1.bf16.msra.mxu0 0
    %192 = vmatprep.subr.bf16.mxu0 0
    %193 = vmatpush1.bf16.msra.mxu0 0
    %194 = vmatprep.subr.bf16.mxu0 0
    %195 = vmatpush1.bf16.msra.mxu0 0
    %196 = vmatprep.subr.bf16.mxu0 0
    %197 = vmatpush1.bf16.msra.mxu0 0
    %198 = vmatprep.subr.bf16.mxu0 0
    %199 = vmatpush1.bf16.msra.mxu0 0
    %200 = vmatprep.subr.bf16.mxu0 0
    %201 = vmatpush1.bf16.msra.mxu0 0
    %202 = vmatprep.subr.bf16.mxu0 %v138
    %203 = vmatpush1.bf16.msra.mxu0 %v137
    %204 = vmatprep.subr.bf16.mxu0 0
    %205 = vmatpush2.bf16.msra.mxu0 0
    %206 = vmatprep.subr.bf16.mxu0 0
    %207 = vmatpush2.bf16.msra.mxu0 0
    %208 = vmatprep.subr.bf16.mxu0 0
    %209 = vmatpush2.bf16.msra.mxu0 0
    %210 = vmatprep.subr.bf16.mxu0 0
    %211 = vmatpush2.bf16.msra.mxu0 0
    %212 = vmatprep.subr.bf16.mxu0 0
    %213 = vmatpush2.bf16.msra.mxu0 0
    %214 = vmatprep.subr.bf16.mxu0 0
    %215 = vmatpush2.bf16.msra.mxu0 0
    %216 = vmatprep.subr.bf16.mxu0 0
    %217 = vmatpush2.bf16.msra.mxu0 0
    %218 = vmatprep.subr.bf16.mxu0 0
    %219 = vmatpush2.bf16.msra.mxu0 0
    %220 = vmatprep.mubr.bf16.mxu0 0
    %221 = vmatmul.mubr.bf16.gmra.mxu0 %v145
    %v222 = vpop.f32.mrf.mxu0
    %v223 = vadd.f32 %v114, %v222
    %v224 = vpop.f32.mrf.mxu0
    %v225 = vadd.f32 %v118, %v224
    %v226 = vpop.f32.mrf.mxu0
    %v227 = vpop.f32.mrf.mxu0
    %228 = vdwg.mxu0
    %s229 = sld [smem:[#allocation2]]
    %vm230 = vcmp.ge.f32.partialorder %v182, 0.0
    %vm231 = vcmp.ge.f32.partialorder %v184, 0.0
    %vm232 = vcmp.ge.f32.partialorder %v223, 0.0
    %vm233 = vcmp.ge.f32.partialorder %v225, 0.0
    %v234 = vstv %s229
    %v235 = vmul.f32 %v234, %v182
    %v236 = vmul.f32 %v234, %v184
    %v237 = vmul.f32 %v234, %v223
    %v238 = vmul.f32 %v234, %v225
    %v239 = vsel %vm230, %v182, %v235
    %v240 = vsel %vm231, %v184, %v236
    %v241 = vsel %vm232, %v223, %v237
    %v242 = vsel %vm233, %v225, %v238
    %v243 = vld [vmem:[#allocation6] sm:$0xff]
    %v244 = vld [vmem:[#allocation6 + $0x8] sm:$0xff]
    %v245 = vld [vmem:[#allocation6 + $0x10] sm:$0xff]
    %v246 = vld [vmem:[#allocation6 + $0x18] sm:$0xff]
    %v247 = vld [vmem:[#allocation6 + $0x20] sm:$0xff]
    %v248 = vld [vmem:[#allocation6 + $0x28] sm:$0xff]
    %v249 = vld [vmem:[#allocation6 + $0x30] sm:$0xff]
    %v250 = vld [vmem:[#allocation6 + $0x38] sm:$0xff]
    %v251 = vld [vmem:[#allocation6 + $0x40] sm:$0xff]
    %v252 = vld [vmem:[#allocation6 + $0x48] sm:$0xff]
    %v253 = vld [vmem:[#allocation6 + $0x50] sm:$0xff]
    %v254 = vld [vmem:[#allocation6 + $0x58] sm:$0xff]
    %v255 = vld [vmem:[#allocation6 + $0x60] sm:$0xff]
    %v256 = vld [vmem:[#allocation6 + $0x68] sm:$0xff]
    %v257 = vld [vmem:[#allocation6 + $0x70] sm:$0xff]
    %v258 = vld [vmem:[#allocation6 + $0x78] sm:$0xff]
    %v259 = vld [vmem:[#allocation6 + $0x80] sm:$0xff]
    %v260 = vld [vmem:[#allocation6 + $0x88] sm:$0xff]
    %v261 = vld [vmem:[#allocation6 + $0x90] sm:$0xff]
    %v262 = vld [vmem:[#allocation6 + $0x98] sm:$0xff]
    %v263 = vld [vmem:[#allocation6 + $0xa0] sm:$0xff]
    %v264 = vld [vmem:[#allocation6 + $0xa8] sm:$0xff]
    %v265 = vld [vmem:[#allocation6 + $0xb0] sm:$0xff]
    %v266 = vld [vmem:[#allocation6 + $0xb8] sm:$0xff]
    %v267 = vld [vmem:[#allocation6 + $0xc0] sm:$0xff]
    %v268 = vld [vmem:[#allocation6 + $0xc8] sm:$0xff]
    %v269 = vld [vmem:[#allocation6 + $0xd0] sm:$0xff]
    %v270 = vld [vmem:[#allocation6 + $0xd8] sm:$0xff]
    %v271 = vld [vmem:[#allocation6 + $0xe0] sm:$0xff]
    %v272 = vld [vmem:[#allocation6 + $0xe8] sm:$0xff]
    %v273 = vld [vmem:[#allocation6 + $0xf0] sm:$0xff]
    %v274 = vld [vmem:[#allocation6 + $0xf8] sm:$0xff]
    %v275 = vld [vmem:[#allocation6 + $0x100] sm:$0xff]
    %v276 = vld [vmem:[#allocation6 + $0x108] sm:$0xff]
    %v277 = vld [vmem:[#allocation6 + $0x110] sm:$0xff]
    %v278 = vld [vmem:[#allocation6 + $0x118] sm:$0xff]
    %v279 = vld [vmem:[#allocation6 + $0x120] sm:$0xff]
    %v280 = vld [vmem:[#allocation6 + $0x128] sm:$0xff]
    %v281 = vld [vmem:[#allocation6 + $0x130] sm:$0xff]
    %v282 = vld [vmem:[#allocation6 + $0x138] sm:$0xff]
    %v283 = vld [vmem:[#allocation6 + $0x140] sm:$0xff]
    %v284 = vld [vmem:[#allocation6 + $0x148] sm:$0xff]
    %v285 = vld [vmem:[#allocation6 + $0x150] sm:$0xff]
    %v286 = vld [vmem:[#allocation6 + $0x158] sm:$0xff]
    %v287 = vld [vmem:[#allocation6 + $0x160] sm:$0xff]
    %v288 = vld [vmem:[#allocation6 + $0x168] sm:$0xff]
    %v289 = vld [vmem:[#allocation6 + $0x170] sm:$0xff]
    %v290 = vld [vmem:[#allocation6 + $0x178] sm:$0xff]
    %v291 = vld [vmem:[#allocation6 + $0x180] sm:$0xff]
    %v292 = vld [vmem:[#allocation6 + $0x188] sm:$0xff]
    %v293 = vld [vmem:[#allocation6 + $0x190] sm:$0xff]
    %v294 = vld [vmem:[#allocation6 + $0x198] sm:$0xff]
    %v295 = vld [vmem:[#allocation6 + $0x1a0] sm:$0xff]
    %v296 = vld [vmem:[#allocation6 + $0x1a8] sm:$0xff]
    %v297 = vld [vmem:[#allocation6 + $0x1b0] sm:$0xff]
    %v298 = vld [vmem:[#allocation6 + $0x1b8] sm:$0xff]
    %v299 = vld [vmem:[#allocation6 + $0x1c0] sm:$0xff]
    %v300 = vld [vmem:[#allocation6 + $0x1c8] sm:$0xff]
    %v301 = vld [vmem:[#allocation6 + $0x1d0] sm:$0xff]
    %v302 = vld [vmem:[#allocation6 + $0x1d8] sm:$0xff]
    %v303 = vld [vmem:[#allocation6 + $0x1e0] sm:$0xff]
    %v304 = vld [vmem:[#allocation6 + $0x1e8] sm:$0xff]
    %v305 = vld [vmem:[#allocation6 + $0x1f0] sm:$0xff]
    %v306 = vld [vmem:[#allocation6 + $0x1f8] sm:$0xff]
    %v307 = vpack.c.bf16 %v239, %v239
    %v308 = vpack.c.bf16 %v240, %v240
    %v309 = vpack.c.bf16 %v241, %v241
    %v310 = vpack.c.bf16 %v242, %v242
    %v311 = vld [vmem:[%s6 + $0x4] sm:$0x3]
    %v313 = vlaneseq
    %v314 = vshrl.u32 %v313, 7
    %v315 = vsub.s32 0, %v314
    %v316 = vrot.slane %v311, %v315
    %v317 = vlaneseq
    %v318 = vshrl.u32 %v317, 7
    %v319 = vsub.s32 1, %v318
    %v320 = vrot.slane %v311, %v319
    %v387 = vunpack.c.l.b16 %v243
    %v388 = vunpack.c.h.b16 %v243
    %v389 = vunpack.c.l.b16 %v244
    %v390 = vunpack.c.h.b16 %v244
    %v391 = vunpack.c.l.b16 %v245
    %v392 = vunpack.c.h.b16 %v245
    %v393 = vunpack.c.l.b16 %v246
    %v394 = vunpack.c.h.b16 %v246
    %v395 = vunpack.c.l.b16 %v247
    %v396 = vunpack.c.h.b16 %v247
    %v397 = vunpack.c.l.b16 %v248
    %v398 = vunpack.c.h.b16 %v248
    %v399 = vunpack.c.l.b16 %v249
    %v400 = vunpack.c.h.b16 %v249
    %v401 = vunpack.c.l.b16 %v250
    %v402 = vunpack.c.h.b16 %v250
    %v403 = vunpack.c.l.b16 %v251
    %v404 = vunpack.c.h.b16 %v251
    %v405 = vunpack.c.l.b16 %v252
    %v406 = vunpack.c.h.b16 %v252
    %v407 = vunpack.c.l.b16 %v253
    %v408 = vunpack.c.h.b16 %v253
    %v409 = vunpack.c.l.b16 %v254
    %v410 = vunpack.c.h.b16 %v254
    %v411 = vunpack.c.l.b16 %v255
    %v412 = vunpack.c.h.b16 %v255
    %v413 = vunpack.c.l.b16 %v256
    %v414 = vunpack.c.h.b16 %v256
    %v415 = vunpack.c.l.b16 %v257
    %v416 = vunpack.c.h.b16 %v257
    %v417 = vunpack.c.l.b16 %v258
    %v418 = vunpack.c.h.b16 %v258
    %v419 = vunpack.c.l.b16 %v259
    %v420 = vunpack.c.h.b16 %v259
    %v421 = vunpack.c.l.b16 %v260
    %v422 = vunpack.c.h.b16 %v260
    %v423 = vunpack.c.l.b16 %v261
    %v424 = vunpack.c.h.b16 %v261
    %v425 = vunpack.c.l.b16 %v262
    %v426 = vunpack.c.h.b16 %v262
    %v427 = vunpack.c.l.b16 %v263
    %v428 = vunpack.c.h.b16 %v263
    %v429 = vunpack.c.l.b16 %v264
    %v430 = vunpack.c.h.b16 %v264
    %v431 = vunpack.c.l.b16 %v265
    %v432 = vunpack.c.h.b16 %v265
    %v433 = vunpack.c.l.b16 %v266
    %v434 = vunpack.c.h.b16 %v266
    %v435 = vunpack.c.l.b16 %v267
    %v436 = vunpack.c.h.b16 %v267
    %v437 = vunpack.c.l.b16 %v268
    %v438 = vunpack.c.h.b16 %v268
    %v439 = vunpack.c.l.b16 %v269
    %v440 = vunpack.c.h.b16 %v269
    %v441 = vunpack.c.l.b16 %v270
    %v442 = vunpack.c.h.b16 %v270
    %v443 = vunpack.c.l.b16 %v271
    %v444 = vunpack.c.h.b16 %v271
    %v445 = vunpack.c.l.b16 %v272
    %v446 = vunpack.c.h.b16 %v272
    %v447 = vunpack.c.l.b16 %v273
    %v448 = vunpack.c.h.b16 %v273
    %v449 = vunpack.c.l.b16 %v274
    %v450 = vunpack.c.h.b16 %v274
    %v451 = vunpack.c.l.b16 %v275
    %v452 = vunpack.c.h.b16 %v275
    %v453 = vunpack.c.l.b16 %v276
    %v454 = vunpack.c.h.b16 %v276
    %v455 = vunpack.c.l.b16 %v277
    %v456 = vunpack.c.h.b16 %v277
    %v457 = vunpack.c.l.b16 %v278
    %v458 = vunpack.c.h.b16 %v278
    %v459 = vunpack.c.l.b16 %v279
    %v460 = vunpack.c.h.b16 %v279
    %v461 = vunpack.c.l.b16 %v280
    %v462 = vunpack.c.h.b16 %v280
    %v463 = vunpack.c.l.b16 %v281
    %v464 = vunpack.c.h.b16 %v281
    %v465 = vunpack.c.l.b16 %v282
    %v466 = vunpack.c.h.b16 %v282
    %v467 = vunpack.c.l.b16 %v283
    %v468 = vunpack.c.h.b16 %v283
    %v469 = vunpack.c.l.b16 %v284
    %v470 = vunpack.c.h.b16 %v284
    %v471 = vunpack.c.l.b16 %v285
    %v472 = vunpack.c.h.b16 %v285
    %v473 = vunpack.c.l.b16 %v286
    %v474 = vunpack.c.h.b16 %v286
    %v475 = vunpack.c.l.b16 %v287
    %v476 = vunpack.c.h.b16 %v287
    %v477 = vunpack.c.l.b16 %v288
    %v478 = vunpack.c.h.b16 %v288
    %v479 = vunpack.c.l.b16 %v289
    %v480 = vunpack.c.h.b16 %v289
    %v481 = vunpack.c.l.b16 %v290
    %v482 = vunpack.c.h.b16 %v290
    %v483 = vunpack.c.l.b16 %v291
    %v484 = vunpack.c.h.b16 %v291
    %v485 = vunpack.c.l.b16 %v292
    %v486 = vunpack.c.h.b16 %v292
    %v487 = vunpack.c.l.b16 %v293
    %v488 = vunpack.c.h.b16 %v293
    %v489 = vunpack.c.l.b16 %v294
    %v490 = vunpack.c.h.b16 %v294
    %v491 = vunpack.c.l.b16 %v295
    %v492 = vunpack.c.h.b16 %v295
    %v493 = vunpack.c.l.b16 %v296
    %v494 = vunpack.c.h.b16 %v296
    %v495 = vunpack.c.l.b16 %v297
    %v496 = vunpack.c.h.b16 %v297
    %v497 = vunpack.c.l.b16 %v298
    %v498 = vunpack.c.h.b16 %v298
    %v499 = vunpack.c.l.b16 %v299
    %v500 = vunpack.c.h.b16 %v299
    %v501 = vunpack.c.l.b16 %v300
    %v502 = vunpack.c.h.b16 %v300
    %v503 = vunpack.c.l.b16 %v301
    %v504 = vunpack.c.h.b16 %v301
    %v505 = vunpack.c.l.b16 %v302
    %v506 = vunpack.c.h.b16 %v302
    %v507 = vunpack.c.l.b16 %v303
    %v508 = vunpack.c.h.b16 %v303
    %v509 = vunpack.c.l.b16 %v304
    %v510 = vunpack.c.h.b16 %v304
    %v511 = vunpack.c.l.b16 %v305
    %v512 = vunpack.c.h.b16 %v305
    %v513 = vunpack.c.l.b16 %v306
    %v514 = vunpack.c.h.b16 %v306
    %v515 = vpack.c.b16 %v389, %v387
    %v516 = vpack.c.b16 %v390, %v388
    %v517 = vpack.c.b16 %v393, %v391
    %v518 = vpack.c.b16 %v394, %v392
    %v519 = vpack.c.b16 %v397, %v395
    %v520 = vpack.c.b16 %v398, %v396
    %v521 = vpack.c.b16 %v401, %v399
    %v522 = vpack.c.b16 %v402, %v400
    %v523 = vpack.c.b16 %v405, %v403
    %v524 = vpack.c.b16 %v406, %v404
    %v525 = vpack.c.b16 %v409, %v407
    %v526 = vpack.c.b16 %v410, %v408
    %v527 = vpack.c.b16 %v413, %v411
    %v528 = vpack.c.b16 %v414, %v412
    %v529 = vpack.c.b16 %v417, %v415
    %v530 = vpack.c.b16 %v418, %v416
    %v531 = vpack.c.b16 %v421, %v419
    %v532 = vpack.c.b16 %v422, %v420
    %v533 = vpack.c.b16 %v425, %v423
    %v534 = vpack.c.b16 %v426, %v424
    %v535 = vpack.c.b16 %v429, %v427
    %v536 = vpack.c.b16 %v430, %v428
    %v537 = vpack.c.b16 %v433, %v431
    %v538 = vpack.c.b16 %v434, %v432
    %v539 = vpack.c.b16 %v437, %v435
    %v540 = vpack.c.b16 %v438, %v436
    %v541 = vpack.c.b16 %v441, %v439
    %v542 = vpack.c.b16 %v442, %v440
    %v543 = vpack.c.b16 %v445, %v443
    %v544 = vpack.c.b16 %v446, %v444
    %v545 = vpack.c.b16 %v449, %v447
    %v546 = vpack.c.b16 %v450, %v448
    %v547 = vpack.c.b16 %v453, %v451
    %v548 = vpack.c.b16 %v454, %v452
    %v549 = vpack.c.b16 %v457, %v455
    %v550 = vpack.c.b16 %v458, %v456
    %v551 = vpack.c.b16 %v461, %v459
    %v552 = vpack.c.b16 %v462, %v460
    %v553 = vpack.c.b16 %v465, %v463
    %v554 = vpack.c.b16 %v466, %v464
    %v555 = vpack.c.b16 %v469, %v467
    %v556 = vpack.c.b16 %v470, %v468
    %v557 = vpack.c.b16 %v473, %v471
    %v558 = vpack.c.b16 %v474, %v472
    %v559 = vpack.c.b16 %v477, %v475
    %v560 = vpack.c.b16 %v478, %v476
    %v561 = vpack.c.b16 %v481, %v479
    %v562 = vpack.c.b16 %v482, %v480
    %v563 = vpack.c.b16 %v485, %v483
    %v564 = vpack.c.b16 %v486, %v484
    %v565 = vpack.c.b16 %v489, %v487
    %v566 = vpack.c.b16 %v490, %v488
    %v567 = vpack.c.b16 %v493, %v491
    %v568 = vpack.c.b16 %v494, %v492
    %v569 = vpack.c.b16 %v497, %v495
    %v570 = vpack.c.b16 %v498, %v496
    %v571 = vpack.c.b16 %v501, %v499
    %v572 = vpack.c.b16 %v502, %v500
    %v573 = vpack.c.b16 %v505, %v503
    %v574 = vpack.c.b16 %v506, %v504
    %v575 = vpack.c.b16 %v509, %v507
    %v576 = vpack.c.b16 %v510, %v508
    %v577 = vpack.c.b16 %v513, %v511
    %v578 = vpack.c.b16 %v514, %v512
    %643 = vmatprep.subr.bf16.mxu0 %v530
    %644 = vmatpush1.bf16.msra.mxu0 %v529
    %645 = vmatprep.subr.bf16.mxu0 %v528
    %646 = vmatpush1.bf16.msra.mxu0 %v527
    %647 = vmatprep.subr.bf16.mxu0 %v526
    %648 = vmatpush1.bf16.msra.mxu0 %v525
    %649 = vmatprep.subr.bf16.mxu0 %v524
    %650 = vmatpush1.bf16.msra.mxu0 %v523
    %651 = vmatprep.subr.bf16.mxu0 %v522
    %652 = vmatpush1.bf16.msra.mxu0 %v521
    %653 = vmatprep.subr.bf16.mxu0 %v520
    %654 = vmatpush1.bf16.msra.mxu0 %v519
    %655 = vmatprep.subr.bf16.mxu0 %v518
    %656 = vmatpush1.bf16.msra.mxu0 %v517
    %657 = vmatprep.subr.bf16.mxu0 %v516
    %658 = vmatpush1.bf16.msra.mxu0 %v515
    %659 = vmatprep.subr.bf16.mxu0 %v546
    %660 = vmatpush2.bf16.msra.mxu0 %v545
    %661 = vmatprep.subr.bf16.mxu0 %v544
    %662 = vmatpush2.bf16.msra.mxu0 %v543
    %663 = vmatprep.subr.bf16.mxu0 %v542
    %664 = vmatpush2.bf16.msra.mxu0 %v541
    %665 = vmatprep.subr.bf16.mxu0 %v540
    %666 = vmatpush2.bf16.msra.mxu0 %v539
    %667 = vmatprep.subr.bf16.mxu0 %v538
    %668 = vmatpush2.bf16.msra.mxu0 %v537
    %669 = vmatprep.subr.bf16.mxu0 %v536
    %670 = vmatpush2.bf16.msra.mxu0 %v535
    %671 = vmatprep.subr.bf16.mxu0 %v534
    %672 = vmatpush2.bf16.msra.mxu0 %v533
    %673 = vmatprep.subr.bf16.mxu0 %v532
    %674 = vmatpush2.bf16.msra.mxu0 %v531
    %675 = vmatprep.mubr.bf16.mxu0 %v308
    %676 = vmatmul.mubr.bf16.gmra.mxu0 %v307
    %v677 = vpop.f32.mrf.mxu0
    %v678 = vadd.f32 %v316, %v677
    %v679 = vpop.f32.mrf.mxu0
    %v680 = vadd.f32 %v320, %v679
    %v681 = vpop.f32.mrf.mxu0
    %v682 = vpop.f32.mrf.mxu0
    %683 = vdwg.mxu0
    %684 = vmatprep.subr.bf16.mxu0 %v562
    %685 = vmatpush1.bf16.msra.mxu0 %v561
    %686 = vmatprep.subr.bf16.mxu0 %v560
    %687 = vmatpush1.bf16.msra.mxu0 %v559
    %688 = vmatprep.subr.bf16.mxu0 %v558
    %689 = vmatpush1.bf16.msra.mxu0 %v557
    %690 = vmatprep.subr.bf16.mxu0 %v556
    %691 = vmatpush1.bf16.msra.mxu0 %v555
    %692 = vmatprep.subr.bf16.mxu0 %v554
    %693 = vmatpush1.bf16.msra.mxu0 %v553
    %694 = vmatprep.subr.bf16.mxu0 %v552
    %695 = vmatpush1.bf16.msra.mxu0 %v551
    %696 = vmatprep.subr.bf16.mxu0 %v550
    %697 = vmatpush1.bf16.msra.mxu0 %v549
    %698 = vmatprep.subr.bf16.mxu0 %v548
    %699 = vmatpush1.bf16.msra.mxu0 %v547
    %700 = vmatprep.subr.bf16.mxu0 %v578
    %701 = vmatpush2.bf16.msra.mxu0 %v577
    %702 = vmatprep.subr.bf16.mxu0 %v576
    %703 = vmatpush2.bf16.msra.mxu0 %v575
    %704 = vmatprep.subr.bf16.mxu0 %v574
    %705 = vmatpush2.bf16.msra.mxu0 %v573
    %706 = vmatprep.subr.bf16.mxu0 %v572
    %707 = vmatpush2.bf16.msra.mxu0 %v571
    %708 = vmatprep.subr.bf16.mxu0 %v570
    %709 = vmatpush2.bf16.msra.mxu0 %v569
    %710 = vmatprep.subr.bf16.mxu0 %v568
    %711 = vmatpush2.bf16.msra.mxu0 %v567
    %712 = vmatprep.subr.bf16.mxu0 %v566
    %713 = vmatpush2.bf16.msra.mxu0 %v565
    %714 = vmatprep.subr.bf16.mxu0 %v564
    %715 = vmatpush2.bf16.msra.mxu0 %v563
    %716 = vmatprep.mubr.bf16.mxu0 %v310
    %717 = vmatmul.mubr.bf16.gmra.mxu0 %v309
    %v718 = vpop.f32.mrf.mxu0
    %v719 = vadd.f32 %v678, %v718
    %v720 = vpop.f32.mrf.mxu0
    %v721 = vadd.f32 %v680, %v720
    %v722 = vpop.f32.mrf.mxu0
    %v723 = vpop.f32.mrf.mxu0
    %724 = vdwg.mxu0
    %s725 = sld [smem:[#allocation2 + $0x1]]
    %vm726 = vcmp.ge.f32.partialorder %v719, 0.0
    %vm727 = vcmp.ge.f32.partialorder %v721, 0.0
    %v728 = vstv %s725
    %v729 = vmul.f32 %v728, %v719
    %v730 = vmul.f32 %v728, %v721
    %v731 = vsel %vm726, %v719, %v729
    %v732 = vsel %vm727, %v721, %v730
    %v733 = vld [vmem:[#allocation8] sm:$0xf]
    %v734 = vld [vmem:[#allocation8 + $0x4] sm:$0xf]
    %v735 = vld [vmem:[#allocation8 + $0x8] sm:$0xf]
    %v736 = vld [vmem:[#allocation8 + $0xc] sm:$0xf]
    %v737 = vld [vmem:[#allocation8 + $0x10] sm:$0xf]
    %v738 = vld [vmem:[#allocation8 + $0x14] sm:$0xf]
    %v739 = vld [vmem:[#allocation8 + $0x18] sm:$0xf]
    %v740 = vld [vmem:[#allocation8 + $0x1c] sm:$0xf]
    %v741 = vld [vmem:[#allocation8 + $0x20] sm:$0xf]
    %v742 = vld [vmem:[#allocation8 + $0x24] sm:$0xf]
    %v743 = vld [vmem:[#allocation8 + $0x28] sm:$0xf]
    %v744 = vld [vmem:[#allocation8 + $0x2c] sm:$0xf]
    %v745 = vld [vmem:[#allocation8 + $0x30] sm:$0xf]
    %v746 = vld [vmem:[#allocation8 + $0x34] sm:$0xf]
    %v747 = vld [vmem:[#allocation8 + $0x38] sm:$0xf]
    %v748 = vld [vmem:[#allocation8 + $0x3c] sm:$0xf]
    %v749 = vld [vmem:[#allocation8 + $0x40] sm:$0xf]
    %v750 = vld [vmem:[#allocation8 + $0x44] sm:$0xf]
    %v751 = vld [vmem:[#allocation8 + $0x48] sm:$0xf]
    %v752 = vld [vmem:[#allocation8 + $0x4c] sm:$0xf]
    %v753 = vld [vmem:[#allocation8 + $0x50] sm:$0xf]
    %v754 = vld [vmem:[#allocation8 + $0x54] sm:$0xf]
    %v755 = vld [vmem:[#allocation8 + $0x58] sm:$0xf]
    %v756 = vld [vmem:[#allocation8 + $0x5c] sm:$0xf]
    %v757 = vld [vmem:[#allocation8 + $0x60] sm:$0xf]
    %v758 = vld [vmem:[#allocation8 + $0x64] sm:$0xf]
    %v759 = vld [vmem:[#allocation8 + $0x68] sm:$0xf]
    %v760 = vld [vmem:[#allocation8 + $0x6c] sm:$0xf]
    %v761 = vld [vmem:[#allocation8 + $0x70] sm:$0xf]
    %v762 = vld [vmem:[#allocation8 + $0x74] sm:$0xf]
    %v763 = vld [vmem:[#allocation8 + $0x78] sm:$0xf]
    %v764 = vld [vmem:[#allocation8 + $0x7c] sm:$0xf]
    %v765 = vpack.c.bf16 %v731, %v731
    %v766 = vpack.c.bf16 %v732, %v732
    %v767 = vld [vmem:[%s6 + $0x6] sm:$0x1]
    %v769 = vlaneseq
    %v770 = vshrl.u32 %v769, 7
    %v771 = vsub.s32 0, %v770
    %v772 = vrot.slane %v767, %v771
    %v806 = vunpack.c.l.b16 %v733
    %v807 = vunpack.c.l.b16 %v734
    %v808 = vunpack.c.l.b16 %v735
    %v809 = vunpack.c.l.b16 %v736
    %v810 = vunpack.c.l.b16 %v737
    %v811 = vunpack.c.l.b16 %v738
    %v812 = vunpack.c.l.b16 %v739
    %v813 = vunpack.c.l.b16 %v740
    %v814 = vunpack.c.l.b16 %v741
    %v815 = vunpack.c.l.b16 %v742
    %v816 = vunpack.c.l.b16 %v743
    %v817 = vunpack.c.l.b16 %v744
    %v818 = vunpack.c.l.b16 %v745
    %v819 = vunpack.c.l.b16 %v746
    %v820 = vunpack.c.l.b16 %v747
    %v821 = vunpack.c.l.b16 %v748
    %v822 = vunpack.c.l.b16 %v749
    %v823 = vunpack.c.l.b16 %v750
    %v824 = vunpack.c.l.b16 %v751
    %v825 = vunpack.c.l.b16 %v752
    %v826 = vunpack.c.l.b16 %v753
    %v827 = vunpack.c.l.b16 %v754
    %v828 = vunpack.c.l.b16 %v755
    %v829 = vunpack.c.l.b16 %v756
    %v830 = vunpack.c.l.b16 %v757
    %v831 = vunpack.c.l.b16 %v758
    %v832 = vunpack.c.l.b16 %v759
    %v833 = vunpack.c.l.b16 %v760
    %v834 = vunpack.c.l.b16 %v761
    %v835 = vunpack.c.l.b16 %v762
    %v836 = vunpack.c.l.b16 %v763
    %v837 = vunpack.c.l.b16 %v764
    %v838 = vpack.c.b16 %v807, %v806
    %v839 = vpack.c.b16 %v809, %v808
    %v840 = vpack.c.b16 %v811, %v810
    %v841 = vpack.c.b16 %v813, %v812
    %v842 = vpack.c.b16 %v815, %v814
    %v843 = vpack.c.b16 %v817, %v816
    %v844 = vpack.c.b16 %v819, %v818
    %v845 = vpack.c.b16 %v821, %v820
    %v846 = vpack.c.b16 %v823, %v822
    %v847 = vpack.c.b16 %v825, %v824
    %v848 = vpack.c.b16 %v827, %v826
    %v849 = vpack.c.b16 %v829, %v828
    %v850 = vpack.c.b16 %v831, %v830
    %v851 = vpack.c.b16 %v833, %v832
    %v852 = vpack.c.b16 %v835, %v834
    %v853 = vpack.c.b16 %v837, %v836
    %870 = vmatprep.subr.bf16.mxu0 0
    %871 = vmatpush1.bf16.msra.mxu0 %v845
    %872 = vmatprep.subr.bf16.mxu0 0
    %873 = vmatpush1.bf16.msra.mxu0 %v844
    %874 = vmatprep.subr.bf16.mxu0 0
    %875 = vmatpush1.bf16.msra.mxu0 %v843
    %876 = vmatprep.subr.bf16.mxu0 0
    %877 = vmatpush1.bf16.msra.mxu0 %v842
    %878 = vmatprep.subr.bf16.mxu0 0
    %879 = vmatpush1.bf16.msra.mxu0 %v841
    %880 = vmatprep.subr.bf16.mxu0 0
    %881 = vmatpush1.bf16.msra.mxu0 %v840
    %882 = vmatprep.subr.bf16.mxu0 0
    %883 = vmatpush1.bf16.msra.mxu0 %v839
    %884 = vmatprep.subr.bf16.mxu0 0
    %885 = vmatpush1.bf16.msra.mxu0 %v838
    %886 = vmatprep.subr.bf16.mxu0 0
    %887 = vmatpush2.bf16.msra.mxu0 %v853
    %888 = vmatprep.subr.bf16.mxu0 0
    %889 = vmatpush2.bf16.msra.mxu0 %v852
    %890 = vmatprep.subr.bf16.mxu0 0
    %891 = vmatpush2.bf16.msra.mxu0 %v851
    %892 = vmatprep.subr.bf16.mxu0 0
    %893 = vmatpush2.bf16.msra.mxu0 %v850
    %894 = vmatprep.subr.bf16.mxu0 0
    %895 = vmatpush2.bf16.msra.mxu0 %v849
    %896 = vmatprep.subr.bf16.mxu0 0
    %897 = vmatpush2.bf16.msra.mxu0 %v848
    %898 = vmatprep.subr.bf16.mxu0 0
    %899 = vmatpush2.bf16.msra.mxu0 %v847
    %900 = vmatprep.subr.bf16.mxu0 0
    %901 = vmatpush2.bf16.msra.mxu0 %v846
    %902 = vmatprep.mubr.bf16.mxu0 %v766
    %903 = vmatmul.mubr.bf16.gmra.mxu0 %v765
    %v904 = vpop.f32.mrf.mxu0
    %v905 = vadd.f32 %v772, %v904
    %v906 = vpop.f32.mrf.mxu0
    %v907 = vpop.f32.mrf.mxu0
    %v908 = vpop.f32.mrf.mxu0
    %909 = vdwg.mxu0
    %s910 = sld [smem:[#allocation2 + $0x2]]
    %vm911 = vcmp.ge.f32.partialorder %v905, 0.0
    %v912 = vstv %s910
    %v913 = vmul.f32 %v912, %v905
    %v914 = vsel %vm911, %v905, %v913
    %v915 = vld [vmem:[#allocation9] sm:$0xf]
    %v916 = vld [vmem:[#allocation9 + $0x4] sm:$0xf]
    %v917 = vld [vmem:[#allocation9 + $0x8] sm:$0xf]
    %v918 = vld [vmem:[#allocation9 + $0xc] sm:$0xf]
    %v919 = vld [vmem:[#allocation9 + $0x10] sm:$0xf]
    %v920 = vld [vmem:[#allocation9 + $0x14] sm:$0xf]
    %v921 = vld [vmem:[#allocation9 + $0x18] sm:$0xf]
    %v922 = vld [vmem:[#allocation9 + $0x1c] sm:$0xf]
    %v923 = vld [vmem:[#allocation9 + $0x20] sm:$0xf]
    %v924 = vld [vmem:[#allocation9 + $0x24] sm:$0xf]
    %v925 = vld [vmem:[#allocation9 + $0x28] sm:$0xf]
    %v926 = vld [vmem:[#allocation9 + $0x2c] sm:$0xf]
    %v927 = vld [vmem:[#allocation9 + $0x30] sm:$0xf]
    %v928 = vld [vmem:[#allocation9 + $0x34] sm:$0xf]
    %v929 = vld [vmem:[#allocation9 + $0x38] sm:$0xf]
    %v930 = vld [vmem:[#allocation9 + $0x3c] sm:$0xf]
    %v931 = vpack.c.bf16 %v914, %v914
    %v932 = vld [vmem:[%s6 + $0x7] sm:$0x1]
    %v934 = vlaneseq
    %v935 = vshrl.u32 %v934, 7
    %v936 = vsub.s32 0, %v935
    %v937 = vrot.slane %v932, %v936
    %v955 = vunpack.c.l.b16 %v915
    %v956 = vunpack.c.l.b16 %v916
    %v957 = vunpack.c.l.b16 %v917
    %v958 = vunpack.c.l.b16 %v918
    %v959 = vunpack.c.l.b16 %v919
    %v960 = vunpack.c.l.b16 %v920
    %v961 = vunpack.c.l.b16 %v921
    %v962 = vunpack.c.l.b16 %v922
    %v963 = vunpack.c.l.b16 %v923
    %v964 = vunpack.c.l.b16 %v924
    %v965 = vunpack.c.l.b16 %v925
    %v966 = vunpack.c.l.b16 %v926
    %v967 = vunpack.c.l.b16 %v927
    %v968 = vunpack.c.l.b16 %v928
    %v969 = vunpack.c.l.b16 %v929
    %v970 = vunpack.c.l.b16 %v930
    %v971 = vpack.c.b16 %v956, %v955
    %v972 = vpack.c.b16 %v958, %v957
    %v973 = vpack.c.b16 %v960, %v959
    %v974 = vpack.c.b16 %v962, %v961
    %v975 = vpack.c.b16 %v964, %v963
    %v976 = vpack.c.b16 %v966, %v965
    %v977 = vpack.c.b16 %v968, %v967
    %v978 = vpack.c.b16 %v970, %v969
    %987 = vmatprep.subr.bf16.mxu0 0
    %988 = vmatpush1.bf16.msra.mxu0 %v978
    %989 = vmatprep.subr.bf16.mxu0 0
    %990 = vmatpush1.bf16.msra.mxu0 %v977
    %991 = vmatprep.subr.bf16.mxu0 0
    %992 = vmatpush1.bf16.msra.mxu0 %v976
    %993 = vmatprep.subr.bf16.mxu0 0
    %994 = vmatpush1.bf16.msra.mxu0 %v975
    %995 = vmatprep.subr.bf16.mxu0 0
    %996 = vmatpush1.bf16.msra.mxu0 %v974
    %997 = vmatprep.subr.bf16.mxu0 0
    %998 = vmatpush1.bf16.msra.mxu0 %v973
    %999 = vmatprep.subr.bf16.mxu0 0
    %1000 = vmatpush1.bf16.msra.mxu0 %v972
    %1001 = vmatprep.subr.bf16.mxu0 0
    %1002 = vmatpush1.bf16.msra.mxu0 %v971
    %1003 = vmatprep.subr.bf16.mxu0 0
    %1004 = vmatpush2.bf16.msra.mxu0 0
    %1005 = vmatprep.subr.bf16.mxu0 0
    %1006 = vmatpush2.bf16.msra.mxu0 0
    %1007 = vmatprep.subr.bf16.mxu0 0
    %1008 = vmatpush2.bf16.msra.mxu0 0
    %1009 = vmatprep.subr.bf16.mxu0 0
    %1010 = vmatpush2.bf16.msra.mxu0 0
    %1011 = vmatprep.subr.bf16.mxu0 0
    %1012 = vmatpush2.bf16.msra.mxu0 0
    %1013 = vmatprep.subr.bf16.mxu0 0
    %1014 = vmatpush2.bf16.msra.mxu0 0
    %1015 = vmatprep.subr.bf16.mxu0 0
    %1016 = vmatpush2.bf16.msra.mxu0 0
    %1017 = vmatprep.subr.bf16.mxu0 0
    %1018 = vmatpush2.bf16.msra.mxu0 0
    %1019 = vmatprep.mubr.bf16.mxu0 0
    %1020 = vmatmul.mubr.bf16.gmra.mxu0 %v931
    %v1021 = vpop.f32.mrf.mxu0
    %v1022 = vadd.f32 %v937, %v1021
    %v1023 = vpop.f32.mrf.mxu0
    %v1024 = vpop.f32.mrf.mxu0
    %v1025 = vpop.f32.mrf.mxu0
    %1026 = vdwg.mxu0
    %s1027 = sld [smem:[#allocation2 + $0x3]]
    %vm1028 = vcmp.ge.f32.partialorder %v1022, 0.0
    %v1029 = vstv %s1027
    %v1030 = vmul.f32 %v1029, %v1022
    %v1031 = vsel %vm1028, %v1022, %v1030
    %v1032 = vld [vmem:[#allocation9 + $0x40] sm:$0xf]
    %v1033 = vld [vmem:[#allocation9 + $0x44] sm:$0xf]
    %v1034 = vld [vmem:[#allocation9 + $0x48] sm:$0xf]
    %v1035 = vld [vmem:[#allocation9 + $0x4c] sm:$0xf]
    %v1036 = vld [vmem:[#allocation9 + $0x50] sm:$0xf]
    %v1037 = vld [vmem:[#allocation9 + $0x54] sm:$0xf]
    %v1038 = vld [vmem:[#allocation9 + $0x58] sm:$0xf]
    %v1039 = vld [vmem:[#allocation9 + $0x5c] sm:$0xf]
    %v1040 = vpack.c.bf16 %v1031, %v1031
    %v1041 = vld [vmem:[%s6 + $0x8] sm:$0x1]
    %v1043 = vlaneseq
    %v1044 = vshrl.u32 %v1043, 7
    %v1045 = vsub.s32 0, %v1044
    %v1046 = vrot.slane %v1041, %v1045
    %v1056 = vunpack.c.l.b16 %v1032
    %v1057 = vunpack.c.l.b16 %v1033
    %v1058 = vunpack.c.l.b16 %v1034
    %v1059 = vunpack.c.l.b16 %v1035
    %v1060 = vunpack.c.l.b16 %v1036
    %v1061 = vunpack.c.l.b16 %v1037
    %v1062 = vunpack.c.l.b16 %v1038
    %v1063 = vunpack.c.l.b16 %v1039
    %v1064 = vpack.c.b16 %v1057, %v1056
    %v1065 = vpack.c.b16 %v1059, %v1058
    %v1066 = vpack.c.b16 %v1061, %v1060
    %v1067 = vpack.c.b16 %v1063, %v1062
    %vm1072 = vcmask 523264
    %v1074 = vsel %vm1072, %v1040, 0
    %1076 = vmatprep.subr.bf16.mxu0 0
    %1077 = vmatpush1.bf16.msra.mxu0 0
    %1078 = vmatprep.subr.bf16.mxu0 0
    %1079 = vmatpush1.bf16.msra.mxu0 0
    %1080 = vmatprep.subr.bf16.mxu0 0
    %1081 = vmatpush1.bf16.msra.mxu0 0
    %1082 = vmatprep.subr.bf16.mxu0 0
    %1083 = vmatpush1.bf16.msra.mxu0 0
    %1084 = vmatprep.subr.bf16.mxu0 0
    %1085 = vmatpush1.bf16.msra.mxu0 %v1067
    %1086 = vmatprep.subr.bf16.mxu0 0
    %1087 = vmatpush1.bf16.msra.mxu0 %v1066
    %1088 = vmatprep.subr.bf16.mxu0 0
    %1089 = vmatpush1.bf16.msra.mxu0 %v1065
    %1090 = vmatprep.subr.bf16.mxu0 0
    %1091 = vmatpush1.bf16.msra.mxu0 %v1064
    %1092 = vmatprep.subr.bf16.mxu0 0
    %1093 = vmatpush2.bf16.msra.mxu0 0
    %1094 = vmatprep.subr.bf16.mxu0 0
    %1095 = vmatpush2.bf16.msra.mxu0 0
    %1096 = vmatprep.subr.bf16.mxu0 0
    %1097 = vmatpush2.bf16.msra.mxu0 0
    %1098 = vmatprep.subr.bf16.mxu0 0
    %1099 = vmatpush2.bf16.msra.mxu0 0
    %1100 = vmatprep.subr.bf16.mxu0 0
    %1101 = vmatpush2.bf16.msra.mxu0 0
    %1102 = vmatprep.subr.bf16.mxu0 0
    %1103 = vmatpush2.bf16.msra.mxu0 0
    %1104 = vmatprep.subr.bf16.mxu0 0
    %1105 = vmatpush2.bf16.msra.mxu0 0
    %1106 = vmatprep.subr.bf16.mxu0 0
    %1107 = vmatpush2.bf16.msra.mxu0 0
    %1108 = vmatprep.mubr.bf16.mxu0 0
    %1109 = vmatmul.mubr.bf16.gmra.mxu0 %v1074
    %v1110 = vpop.f32.mrf.mxu0
    %v1111 = vadd.f32 %v1046, %v1110
    %v1112 = vpop.f32.mrf.mxu0
    %v1113 = vpop.f32.mrf.mxu0
    %v1114 = vpop.f32.mrf.mxu0
    %1115 = vdwg.mxu0
    %s1116 = sld [smem:[#allocation2 + $0x4]]
    %vm1117 = vcmp.ge.f32.partialorder %v1111, 0.0
    %v1118 = vstv %s1116
    %v1119 = vmul.f32 %v1118, %v1111
    %v1120 = vsel %vm1117, %v1111, %v1119
    %v1121 = vld [vmem:[#allocation9 + $0x60] sm:$0xf]
    %v1122 = vld [vmem:[#allocation9 + $0x64] sm:$0xf]
    %v1123 = vld [vmem:[#allocation9 + $0x68] sm:$0xf]
    %v1124 = vld [vmem:[#allocation9 + $0x6c] sm:$0xf]
    %v1125 = vpack.c.bf16 %v1120, %v1120
    %v1126 = vld [vmem:[%s6 + $0x9] sm:$0x1]
    %v1128 = vlaneseq
    %v1129 = vshrl.u32 %v1128, 7
    %v1130 = vsub.s32 0, %v1129
    %v1131 = vrot.slane %v1126, %v1130
    %v1137 = vunpack.c.l.b16 %v1121
    %v1138 = vunpack.c.l.b16 %v1122
    %v1139 = vunpack.c.l.b16 %v1123
    %v1140 = vunpack.c.l.b16 %v1124
    %v1141 = vpack.c.b16 %v1138, %v1137
    %v1142 = vpack.c.b16 %v1140, %v1139
    %vm1145 = vcmask 261120
    %v1147 = vsel %vm1145, %v1125, 0
    %1149 = vmatprep.subr.bf16.mxu0 0
    %1150 = vmatpush1.bf16.msra.mxu0 0
    %1151 = vmatprep.subr.bf16.mxu0 0
    %1152 = vmatpush1.bf16.msra.mxu0 0
    %1153 = vmatprep.subr.bf16.mxu0 0
    %1154 = vmatpush1.bf16.msra.mxu0 0
    %1155 = vmatprep.subr.bf16.mxu0 0
    %1156 = vmatpush1.bf16.msra.mxu0 0
    %1157 = vmatprep.subr.bf16.mxu0 0
    %1158 = vmatpush1.bf16.msra.mxu0 0
    %1159 = vmatprep.subr.bf16.mxu0 0
    %1160 = vmatpush1.bf16.msra.mxu0 0
    %1161 = vmatprep.subr.bf16.mxu0 0
    %1162 = vmatpush1.bf16.msra.mxu0 %v1142
    %1163 = vmatprep.subr.bf16.mxu0 0
    %1164 = vmatpush1.bf16.msra.mxu0 %v1141
    %1165 = vmatprep.subr.bf16.mxu0 0
    %1166 = vmatpush2.bf16.msra.mxu0 0
    %1167 = vmatprep.subr.bf16.mxu0 0
    %1168 = vmatpush2.bf16.msra.mxu0 0
    %1169 = vmatprep.subr.bf16.mxu0 0
    %1170 = vmatpush2.bf16.msra.mxu0 0
    %1171 = vmatprep.subr.bf16.mxu0 0
    %1172 = vmatpush2.bf16.msra.mxu0 0
    %1173 = vmatprep.subr.bf16.mxu0 0
    %1174 = vmatpush2.bf16.msra.mxu0 0
    %1175 = vmatprep.subr.bf16.mxu0 0
    %1176 = vmatpush2.bf16.msra.mxu0 0
    %1177 = vmatprep.subr.bf16.mxu0 0
    %1178 = vmatpush2.bf16.msra.mxu0 0
    %1179 = vmatprep.subr.bf16.mxu0 0
    %1180 = vmatpush2.bf16.msra.mxu0 0
    %1181 = vmatprep.mubr.bf16.mxu0 0
    %1182 = vmatmul.mubr.bf16.gmra.mxu0 %v1147
    %v1183 = vpop.f32.mrf.mxu0
    %v1184 = vadd.f32 %v1131, %v1183
    %v1185 = vpop.f32.mrf.mxu0
    %v1186 = vpop.f32.mrf.mxu0
    %v1187 = vpop.f32.mrf.mxu0
    %1188 = vdwg.mxu0
    %s1189 = sld [smem:[#allocation2 + $0x5]]
    %vm1190 = vcmp.ge.f32.partialorder %v1184, 0.0
    %v1191 = vstv %s1189
    %v1192 = vmul.f32 %v1191, %v1184
    %v1193 = vsel %vm1190, %v1184, %v1192
    %v1194 = vld [vmem:[#allocation9 + $0x70] sm:$0xf]
    %v1195 = vld [vmem:[#allocation9 + $0x74] sm:$0xf]
    %v1196 = vld [vmem:[#allocation9 + $0x78] sm:$0xf]
    %v1197 = vld [vmem:[#allocation9 + $0x7c] sm:$0xf]
    %v1198 = vpack.c.bf16 %v1193, %v1193
    %v1199 = vld [vmem:[%s6 + $0xa] sm:$0x1]
    %v1201 = vlaneseq
    %v1202 = vshrl.u32 %v1201, 7
    %v1203 = vsub.s32 0, %v1202
    %v1204 = vrot.slane %v1199, %v1203
    %v1210 = vunpack.c.l.b16 %v1194
    %v1211 = vunpack.c.l.b16 %v1195
    %v1212 = vunpack.c.l.b16 %v1196
    %v1213 = vunpack.c.l.b16 %v1197
    %v1214 = vpack.c.b16 %v1211, %v1210
    %v1215 = vpack.c.b16 %v1213, %v1212
    %v1219 = vsel %vm1145, %v1198, 0
    %1221 = vmatprep.subr.bf16.mxu0 0
    %1222 = vmatpush1.bf16.msra.mxu0 0
    %1223 = vmatprep.subr.bf16.mxu0 0
    %1224 = vmatpush1.bf16.msra.mxu0 0
    %1225 = vmatprep.subr.bf16.mxu0 0
    %1226 = vmatpush1.bf16.msra.mxu0 0
    %1227 = vmatprep.subr.bf16.mxu0 0
    %1228 = vmatpush1.bf16.msra.mxu0 0
    %1229 = vmatprep.subr.bf16.mxu0 0
    %1230 = vmatpush1.bf16.msra.mxu0 0
    %1231 = vmatprep.subr.bf16.mxu0 0
    %1232 = vmatpush1.bf16.msra.mxu0 0
    %1233 = vmatprep.subr.bf16.mxu0 0
    %1234 = vmatpush1.bf16.msra.mxu0 %v1215
    %1235 = vmatprep.subr.bf16.mxu0 0
    %1236 = vmatpush1.bf16.msra.mxu0 %v1214
    %1237 = vmatprep.subr.bf16.mxu0 0
    %1238 = vmatpush2.bf16.msra.mxu0 0
    %1239 = vmatprep.subr.bf16.mxu0 0
    %1240 = vmatpush2.bf16.msra.mxu0 0
    %1241 = vmatprep.subr.bf16.mxu0 0
    %1242 = vmatpush2.bf16.msra.mxu0 0
    %1243 = vmatprep.subr.bf16.mxu0 0
    %1244 = vmatpush2.bf16.msra.mxu0 0
    %1245 = vmatprep.subr.bf16.mxu0 0
    %1246 = vmatpush2.bf16.msra.mxu0 0
    %1247 = vmatprep.subr.bf16.mxu0 0
    %1248 = vmatpush2.bf16.msra.mxu0 0
    %1249 = vmatprep.subr.bf16.mxu0 0
    %1250 = vmatpush2.bf16.msra.mxu0 0
    %1251 = vmatprep.subr.bf16.mxu0 0
    %1252 = vmatpush2.bf16.msra.mxu0 0
    %1253 = vmatprep.mubr.bf16.mxu0 0
    %1254 = vmatmul.mubr.bf16.gmra.mxu0 %v1219
    %v1255 = vpop.f32.mrf.mxu0
    %v1256 = vadd.f32 %v1204, %v1255
    %v1257 = vpop.f32.mrf.mxu0
    %v1258 = vpop.f32.mrf.mxu0
    %v1259 = vpop.f32.mrf.mxu0
    %1260 = vdwg.mxu0
    %1261 = vst [vmem:[%s7] sm:$0xff] %v1256
    // Predicated region
    $region50: #{decoder_forward.1} parent=1 // pred_check
      _
    $region51: #{decoder_forward.1} parent=1 // pred_check_branch
      %1263 = sbr.rel (0) target = $region53
    $region52: #{decoder_forward.1} parent=1 // pred_region
      _
    $region53: #{decoder_forward.1} parent=1 // pred_fallthru
      _
    // Predicated region
    $region54: #{decoder_forward.1} parent=1 // pred_check
      _
    $region55: #{decoder_forward.1} parent=1 // pred_check_branch
      %1265 = sbr.rel (0) target = $region57
    $region56: #{decoder_forward.1} parent=1 // pred_region
      _
    $region57: #{decoder_forward.1} parent=1 // pred_fallthru
      _
    %1266 = vsyncpa [#allocation3], 1
    %1267 = vsyncpa [#allocation7], 1
    %1268 = vsyncpa [#allocation10], 1
    %1269 = vsyncpa [#allocation4], 1

</llo_original>
